<compile_context>
chip_gen: v7x
topology: tpu7x:2x2x1
jax: 0.10.0
libtpu: 0.0.40
codegen_flags: <defaults>
</compile_context>

<pallas_src>
import numpy as np
import jax
import jax.numpy as jnp
from jax.experimental import pallas as pl
from jax.experimental.pallas import tpu as pltpu

_LANE = 128
_VMEM_LIMIT = 56 * 1024 * 1024   # <64 MiB (v7x physical), > v5e/v6e default scoped limits
_VMEM_BUDGET = 44 * 1024 * 1024  # working-set target used when auto-picking hw_tile


# ----------------------------- static operator matrices -----------------------------

def _pool_matrix(out_size, in_size):
    """Adaptive average pooling along one axis as a (out_size, in_size) matrix."""
    P = np.zeros((out_size, in_size), np.float32)
    for i in range(out_size):
        start = (i * in_size) // out_size
        end = -((-(i + 1) * in_size) // out_size)  # ceil((i+1)*in/out)
        P[i, start:end] = 1.0 / float(end - start)
    return P


def _upsample_matrix(out_size, in_size):
    """Bilinear (align_corners=True) upsampling along one axis as (out_size, in_size)."""
    U = np.zeros((out_size, in_size), np.float32)
    if in_size == 1:
        U[:, 0] = 1.0
        return U
    for i in range(out_size):
        coord = 0.0 if out_size == 1 else i * (in_size - 1) / (out_size - 1)
        lo = int(np.floor(coord))
        hi = min(lo + 1, in_size - 1)
        frac = coord - lo
        U[i, lo] += 1.0 - frac
        U[i, hi] += frac
    return U


def _pool_out_size(sz, dim):
    # matches: max(sz, round(sz * xh / 89))  (Python round, as in torch code)
    return max(sz, round(sz * dim / 89))


# ----------------------------- parameter construction -----------------------------

def make_params(key, in_dim, reduction_dim, bins, H, W):
    """Per-bin (P2d, U2d, w_fold, b_fold): pool/upsample matrices + conv with BN folded."""
    eps = 1e-5
    params = []
    official_sizes = [1, 2, 3, 6]
    for i, sz in enumerate(official_sizes[: len(bins)]):
        k = jax.random.fold_in(key, i)
        kw, kg, kb, km, kv = jax.random.split(k, 5)
        conv_w = jax.random.normal(kw, (reduction_dim, in_dim), jnp.float32) / np.sqrt(in_dim)
        gamma = 1.0 + 0.1 * jax.random.normal(kg, (reduction_dim,), jnp.float32)
        beta = 0.1 * jax.random.normal(kb, (reduction_dim,), jnp.float32)
        rmean = 0.1 * jax.random.normal(km, (reduction_dim,), jnp.float32)
        rvar = jnp.abs(jax.random.normal(kv, (reduction_dim,), jnp.float32)) + 0.5
        scale = gamma / jnp.sqrt(rvar + eps)
        w_fold = conv_w * scale[:, None]          # (R, C)
        b_fold = beta - rmean * scale             # (R,)

        sh = _pool_out_size(sz, H)
        sw = _pool_out_size(sz, W)
        P2d = jnp.asarray(np.kron(_pool_matrix(sh, H), _pool_matrix(sw, W)))          # (S_b, HW)
        U2d = jnp.asarray(np.kron(_upsample_matrix(H, sh), _upsample_matrix(W, sw)))  # (HW, S_b)
        params.append((P2d, U2d, w_fold, b_fold))
    return params


# ----------------------------- tiling helpers -----------------------------

def _round_up(x, m):
    return ((x + m - 1) // m) * m


def _vmem_working_set(C, NBR, Sp, hw_tile):
    """Conservative per-core VMEM estimate (assumes 2 buffers for every input/output)."""
    b = 0
    b += 2 * C * hw_tile * 2        # x block (bf16, double-buffered)
    b += 2 * hw_tile * Sp * 2       # P_allT block
    b += 2 * Sp * hw_tile * 2       # U_allT block
    b += 2 * NBR * C * 2            # W_all (worst case: 2 buffers)
    b += 2 * NBR * _LANE * 4        # bias (lane-padded)
    b += 2 * NBR * Sp * 4           # mask
    b += 2 * NBR * hw_tile * 2      # output block (bf16, double-buffered)
    b += C * Sp * 4 + NBR * Sp * 2  # scratch: pooled accumulator + Z
    b += NBR * hw_tile * 4 + NBR * Sp * 4 + C * Sp * 4  # f32 dot temporaries
    return b


def _pick_hw_tile(HW_pad, C, NBR, Sp, max_tile=1024):
    """Largest lane-dense tile <= max_tile dividing HW_pad whose working set fits the budget."""
    best = _LANE
    for cand in range(_LANE, min(max_tile, HW_pad) + 1, _LANE):
        if HW_pad % cand == 0 and _vmem_working_set(C, NBR, Sp, cand) <= _VMEM_BUDGET:
            best = cand
    return best


# ----------------------------- Pallas kernel + wrapper -----------------------------

def ppm_pallas(x_nchw, params, hw_tile=None):
    N, C, H, W = x_nchw.shape
    HW = H * W
    NB = len(params)
    R = params[0][2].shape[0]
    NBR = NB * R

    sizes = [int(p[0].shape[0]) for p in params]
    S = int(sum(sizes))
    Sp = _round_up(S, _LANE)        # pad pooled axis to full lanes (full-width vregs / MXU)
    HW_pad = _round_up(HW, _LANE)   # pad pixel axis so lane-dense tiles always exist

    # Stacked operators (pixels on lanes, channels on sublanes), zero-padded to Sp / HW_pad.
    P_allT = np.zeros((HW_pad, Sp), np.float32)   # pooled[c,s] = sum_hw x[c,hw] * P_allT[hw,s]
    U_allT = np.zeros((Sp, HW_pad), np.float32)   # up[r,hw]   = sum_s  z[r,s]  * U_allT[s,hw]
    off = 0
    for (p2d, u2d, _, _) in params:
        s = int(p2d.shape[0])
        P_allT[:HW, off:off + s] = np.asarray(p2d).T
        U_allT[off:off + s, :HW] = np.asarray(u2d).T
        off += s
    W_all = jnp.concatenate([p[2] for p in params], axis=0)                   # (NBR, C)
    b_all = jnp.concatenate([p[3] for p in params], axis=0).reshape(NBR, 1)   # (NBR, 1)

    # Block-diagonal selector: bin b's channels only use bin b's pooled columns.
    mask_np = np.zeros((NBR, Sp), np.float32)
    off = 0
    for bi, s in enumerate(sizes):
        mask_np[bi * R:(bi + 1) * R, off:off + s] = 1.0
        off += s

    if hw_tile is None:
        hw_tile = _pick_hw_tile(HW_pad, C, NBR, Sp)
    assert HW_pad % hw_tile == 0 and hw_tile % _LANE == 0, (HW_pad, hw_tile)
    T = HW_pad // hw_tile

    # NCHW is already the desired layout after a reshape — no wrapper transposes.
    x = x_nchw.reshape(N, C, HW).astype(jnp.bfloat16)
    if HW_pad != HW:
        x = jnp.pad(x, ((0, 0), (0, 0), (0, HW_pad - HW)))

    P_bf = jnp.asarray(P_allT, jnp.bfloat16)
    U_bf = jnp.asarray(U_allT, jnp.bfloat16)
    W_bf = W_all.astype(jnp.bfloat16)
    mask = jnp.asarray(mask_np)

    # Constant-index operands (W/bias/mask) only need one VMEM buffer; request it when they
    # are big enough to matter (real PSPNet sizes). Tiny test sizes keep the default.
    single_buf = (NBR * C * 2 + NBR * Sp * 4) >= (4 << 20)
    const_pm = {"pipeline_mode": pl.Buffered(1)} if single_buf else {}

    def kernel(x_ref, pT_ref, uT_ref, w_ref, b_ref, m_ref, o_ref, pooled_acc, z_scr):
        phase = pl.program_id(1)
        t = pl.program_id(2)
        nt = pl.num_programs(2)

        # ---- phase 0: adaptive avg-pool (all bins) accumulated over HW tiles ----
        @pl.when(phase == 0)
        def _pool_phase():
            @pl.when(t == 0)
            def _init():
                pooled_acc[...] = jnp.zeros_like(pooled_acc)

            pooled_acc[...] += jnp.dot(x_ref[0], pT_ref[...],
                                       preferred_element_type=jnp.float32)

            # Last tile: fused 1x1 conv (+ folded BN) + bias + ReLU for all bins,
            # f32 epilogue; block-diagonal mask isolates each bin's pooled columns.
            @pl.when(t == nt - 1)
            def _conv():
                zf = jnp.dot(w_ref[...], pooled_acc[...].astype(jnp.bfloat16),
                             preferred_element_type=jnp.float32)
                zf = jnp.maximum(zf + b_ref[...], 0.0) * m_ref[...]
                z_scr[...] = zf.astype(jnp.bfloat16)

        # ---- phase 1: bilinear upsample (all bins), one lane-dense bf16 store ----
        @pl.when(phase == 1)
        def _upsample_phase():
            up = jnp.dot(z_scr[...], uT_ref[...], preferred_element_type=jnp.float32)
            o_ref[0] = up.astype(o_ref.dtype)

    last = T - 1
    in_specs = [
        # x: streamed over HW tiles in phase 0; frozen at its last block in phase 1 so it is
        # never re-read from HBM (identity channels are concatenated outside the kernel).
        pl.BlockSpec((1, C, hw_tile), lambda n, p, t: (n, 0, t * (1 - p) + last * p)),
        pl.BlockSpec((hw_tile, Sp), lambda n, p, t: (t * (1 - p) + last * p, 0)),  # P (phase 0)
        pl.BlockSpec((Sp, hw_tile), lambda n, p, t: (0, t * p)),                   # U (phase 1)
        pl.BlockSpec((NBR, C), lambda n, p, t: (0, 0), **const_pm),                # W_all
        pl.BlockSpec((NBR, 1), lambda n, p, t: (0, 0), **const_pm),                # bias
        pl.BlockSpec((NBR, Sp), lambda n, p, t: (0, 0), **const_pm),               # mask
    ]
    # During phase 0 the output block index stays at (n, 0, 0); it is only written after
    # phase 1 fills each tile, so there is no garbage/double writeback.
    out_spec = pl.BlockSpec((1, NBR, hw_tile), lambda n, p, t: (n, 0, t * p))

    pyramid = pl.pallas_call(
        kernel,
        out_shape=jax.ShapeDtypeStruct((N, NBR, HW_pad), jnp.bfloat16),
        grid_spec=pltpu.PrefetchScalarGridSpec(
            num_scalar_prefetch=0,
            grid=(N, 2, T),
            in_specs=in_specs,
            out_specs=out_spec,
            scratch_shapes=[
                pltpu.VMEM((C, Sp), jnp.float32),      # pooled accumulator
                pltpu.VMEM((NBR, Sp), jnp.bfloat16),   # post-conv pyramid features
            ],
        ),
        compiler_params=pltpu.CompilerParams(
            dimension_semantics=("parallel", "arbitrary", "arbitrary"),
            vmem_limit_bytes=_VMEM_LIMIT,
        ),
    )(x, P_bf, U_bf, W_bf, b_all, mask)

    pyramid = pyramid[:, :, :HW].astype(jnp.float32).reshape(N, NBR, H, W)
    # Identity channels are the exact f32 input (matches torch.cat([x, ...], 1)). A fused
    # consumer could take (x, pyramid) as two tensors and skip this wrapper concat entirely.
    return jnp.concatenate([x_nchw.astype(jnp.float32), pyramid], axis=1)


# ----------------------------- pure-JAX reference -----------------------------

def ppm_reference(x_nchw, params):
    N, C, H, W = x_nchw.shape
    m = jnp.transpose(x_nchw, (0, 2, 3, 1)).reshape(N, H * W, C).astype(jnp.float32)
    outs = [m]
    for (p2d, u2d, w, b) in params:
        pooled = jnp.einsum("pq,nqc->npc", p2d, m)
        z = jnp.maximum(jnp.einsum("npc,rc->npr", pooled, w) + b[None, None, :], 0.0)
        outs.append(jnp.einsum("qp,npr->nqr", u2d, z))
    y = jnp.concatenate(outs, axis=-1)
    return jnp.transpose(y.reshape(N, H, W, -1), (0, 3, 1, 2))


# ----------------------------- main -----------------------------

if __name__ == "__main__":
    key = jax.random.PRNGKey(0)
    kx, kp = jax.random.split(key)

    N, C, H, W = 2, 8, 16, 16
    bins = (1, 2, 3, 6)
    R = C // len(bins)  # reduction_dim = in_dim // len(bins), as in PSPNet

    x = jax.random.normal(kx, (N, C, H, W), jnp.float32)
    params = make_params(kp, C, R, bins, H, W)

    # hw_tile=128 exercises the tiled pool-accumulate / upsample-store pipeline (T=2).
    y = ppm_pallas(x, params, hw_tile=128)
    y = jax.block_until_ready(y)

    y_ref = ppm_reference(x, params)
    assert y.shape == (N, C + len(bins) * R, H, W), y.shape
    # Tolerance accounts for bf16 matmul operands and the bf16 pyramid-channel output
    # (f32 accumulation / epilogue; identity channels are exact).
    np.testing.assert_allclose(np.asarray(y), np.asarray(y_ref), atol=3e-2, rtol=3e-2)

    print("KERNEL_OK")
</pallas_src>

<mosaic_0001>
module attributes {stable_mosaic.version = 11 : i64} {
  func.func @kernel(%arg0: i32, %arg1: i32, %arg2: i32, %arg3: memref<1x8x128xbf16, #tpu.memory_space<vmem>>, %arg4: memref<128x128xbf16, #tpu.memory_space<vmem>>, %arg5: memref<128x128xbf16, #tpu.memory_space<vmem>>, %arg6: memref<8x8xbf16, #tpu.memory_space<vmem>>, %arg7: memref<8x1xf32, #tpu.memory_space<vmem>>, %arg8: memref<8x128xf32, #tpu.memory_space<vmem>>, %arg9: memref<1x8x128xbf16, #tpu.memory_space<vmem>>, %arg10: memref<8x128xf32, #tpu.memory_space<vmem>>, %arg11: memref<8x128xbf16, #tpu.memory_space<vmem>>) attributes {dimension_semantics = [#tpu.dimension_semantics<parallel>, #tpu.dimension_semantics<arbitrary>, #tpu.dimension_semantics<arbitrary>], iteration_bounds = array<i64: 2, 2, 2>, scalar_prefetch = 0 : i64, scratch_operands = 2 : i64, tpu.core_type = #tpu.core_type<tc>, window_params = [{transform_indices = @transform_0, window_bounds = array<i64: 1, 8, 128>}, {transform_indices = @transform_1, window_bounds = array<i64: 128, 128>}, {transform_indices = @transform_2, window_bounds = array<i64: 128, 128>}, {pipeline_mode = #tpu.pipeline_mode<synchronous>, transform_indices = @transform_3, window_bounds = array<i64: 8, 8>}, {pipeline_mode = #tpu.pipeline_mode<synchronous>, transform_indices = @transform_4, window_bounds = array<i64: 8, 1>}, {pipeline_mode = #tpu.pipeline_mode<synchronous>, transform_indices = @transform_5, window_bounds = array<i64: 8, 128>}, {transform_indices = @transform_6, window_bounds = array<i64: 1, 8, 128>}]} {
    %c0_i32 = arith.constant 0 : i32
    %0 = arith.cmpi eq, %arg1, %c0_i32 : i32
    %1 = arith.extui %0 : i1 to i32
    %c0_i32_0 = arith.constant 0 : i32
    %2 = arith.cmpi ne, %1, %c0_i32_0 : i32
    scf.if %2 {
      %c0_i32_2 = arith.constant 0 : i32
      %6 = arith.cmpi eq, %arg2, %c0_i32_2 : i32
      %7 = arith.extui %6 : i1 to i32
      %c0_i32_3 = arith.constant 0 : i32
      %8 = arith.cmpi ne, %7, %c0_i32_3 : i32
      scf.if %8 {
        %cst_14 = arith.constant 0.000000e+00 : f32
        %19 = vector.broadcast %cst_14 : f32 to vector<8x128xf32>
        %c0_15 = arith.constant 0 : index
        %c0_16 = arith.constant 0 : index
        %20 = vector.load %arg10[%c0_15, %c0_16] : memref<8x128xf32, #tpu.memory_space<vmem>>, vector<8x128xf32>
        tpu.vector_store %arg10[%c0_15, %c0_16], %19 {strides = array<i32>} : memref<8x128xf32, #tpu.memory_space<vmem>>, vector<8x128xf32>,
      } else {
      }
      %c0 = arith.constant 0 : index
      %c0_4 = arith.constant 0 : index
      %9 = vector.load %arg10[%c0, %c0_4] : memref<8x128xf32, #tpu.memory_space<vmem>>, vector<8x128xf32>
      %c0_5 = arith.constant 0 : index
      %c0_6 = arith.constant 0 : index
      %c0_7 = arith.constant 0 : index
      %10 = vector.load %arg3[%c0_5, %c0_6, %c0_7] : memref<1x8x128xbf16, #tpu.memory_space<vmem>>, vector<1x8x128xbf16>
      %11 = vector.shape_cast %10 : vector<1x8x128xbf16> to vector<8x128xbf16>
      %c0_8 = arith.constant 0 : index
      %c0_9 = arith.constant 0 : index
      %12 = vector.load %arg4[%c0_8, %c0_9] : memref<128x128xbf16, #tpu.memory_space<vmem>>, vector<128x128xbf16>
      %cst = arith.constant dense<0.000000e+00> : vector<8x128xf32>
      %13 = tpu.matmul %11, %12, %cst {dimension_numbers = #tpu.dot_dimension_numbers<[1], [0], [0], [1], [0, 0, 1, 1], [], []>} : vector<8x128xbf16>, vector<128x128xbf16>, vector<8x128xf32> -> vector<8x128xf32>
      %14 = arith.addf %9, %13 : vector<8x128xf32>
      %c0_10 = arith.constant 0 : index
      %c0_11 = arith.constant 0 : index
      %15 = vector.load %arg10[%c0_10, %c0_11] : memref<8x128xf32, #tpu.memory_space<vmem>>, vector<8x128xf32>
      tpu.vector_store %arg10[%c0_10, %c0_11], %14 {strides = array<i32>} : memref<8x128xf32, #tpu.memory_space<vmem>>, vector<8x128xf32>,
      %c1_i32_12 = arith.constant 1 : i32
      %16 = arith.cmpi eq, %arg2, %c1_i32_12 : i32
      %17 = arith.extui %16 : i1 to i32
      %c0_i32_13 = arith.constant 0 : i32
      %18 = arith.cmpi ne, %17, %c0_i32_13 : i32
      scf.if %18 {
        %c0_14 = arith.constant 0 : index
        %c0_15 = arith.constant 0 : index
        %19 = vector.load %arg6[%c0_14, %c0_15] : memref<8x8xbf16, #tpu.memory_space<vmem>>, vector<8x8xbf16>
        %c0_16 = arith.constant 0 : index
        %c0_17 = arith.constant 0 : index
        %20 = vector.load %arg10[%c0_16, %c0_17] : memref<8x128xf32, #tpu.memory_space<vmem>>, vector<8x128xf32>
        %21 = arith.truncf %20 : vector<8x128xf32> to vector<8x128xbf16>
        %cst_18 = arith.constant dense<0.000000e+00> : vector<8x128xf32>
        %22 = tpu.matmul %19, %21, %cst_18 {dimension_numbers = #tpu.dot_dimension_numbers<[1], [0], [0], [1], [0, 0, 1, 1], [], []>} : vector<8x8xbf16>, vector<8x128xbf16>, vector<8x128xf32> -> vector<8x128xf32>
        %c0_19 = arith.constant 0 : index
        %c0_20 = arith.constant 0 : index
        %23 = vector.load %arg7[%c0_19, %c0_20] : memref<8x1xf32, #tpu.memory_space<vmem>>, vector<8x1xf32>
        %24 = vector.broadcast %23 : vector<8x1xf32> to vector<8x128xf32>
        %25 = arith.addf %22, %24 : vector<8x128xf32>
        %cst_21 = arith.constant 0.000000e+00 : f32
        %26 = vector.broadcast %cst_21 : f32 to vector<8x128xf32>
        %27 = arith.maximumf %25, %26 : vector<8x128xf32>
        %c0_22 = arith.constant 0 : index
        %c0_23 = arith.constant 0 : index
        %28 = vector.load %arg8[%c0_22, %c0_23] : memref<8x128xf32, #tpu.memory_space<vmem>>, vector<8x128xf32>
        %29 = arith.mulf %27, %28 : vector<8x128xf32>
        %30 = arith.truncf %29 : vector<8x128xf32> to vector<8x128xbf16>
        %c0_24 = arith.constant 0 : index
        %c0_25 = arith.constant 0 : index
        %31 = vector.load %arg11[%c0_24, %c0_25] : memref<8x128xbf16, #tpu.memory_space<vmem>>, vector<8x128xbf16>
        tpu.vector_store %arg11[%c0_24, %c0_25], %30 {strides = array<i32>} : memref<8x128xbf16, #tpu.memory_space<vmem>>, vector<8x128xbf16>,
      } else {
      }
    } else {
    }
    %c1_i32 = arith.constant 1 : i32
    %3 = arith.cmpi eq, %arg1, %c1_i32 : i32
    %4 = arith.extui %3 : i1 to i32
    %c0_i32_1 = arith.constant 0 : i32
    %5 = arith.cmpi ne, %4, %c0_i32_1 : i32
    scf.if %5 {
      %c0 = arith.constant 0 : index
      %c0_2 = arith.constant 0 : index
      %6 = vector.load %arg11[%c0, %c0_2] : memref<8x128xbf16, #tpu.memory_space<vmem>>, vector<8x128xbf16>
      %c0_3 = arith.constant 0 : index
      %c0_4 = arith.constant 0 : index
      %7 = vector.load %arg5[%c0_3, %c0_4] : memref<128x128xbf16, #tpu.memory_space<vmem>>, vector<128x128xbf16>
      %cst = arith.constant dense<0.000000e+00> : vector<8x128xf32>
      %8 = tpu.matmul %6, %7, %cst {dimension_numbers = #tpu.dot_dimension_numbers<[1], [0], [0], [1], [0, 0, 1, 1], [], []>} : vector<8x128xbf16>, vector<128x128xbf16>, vector<8x128xf32> -> vector<8x128xf32>
      %9 = arith.truncf %8 : vector<8x128xf32> to vector<8x128xbf16>
      %c0_5 = arith.constant 0 : index
      %c0_6 = arith.constant 0 : index
      %c0_7 = arith.constant 0 : index
      %10 = vector.load %arg9[%c0_5, %c0_6, %c0_7] : memref<1x8x128xbf16, #tpu.memory_space<vmem>>, vector<1x8x128xbf16>
      %11 = vector.shape_cast %10 : vector<1x8x128xbf16> to vector<8x128xbf16>
      %12 = vector.shape_cast %9 : vector<8x128xbf16> to vector<1x8x128xbf16>
      tpu.vector_store %arg9[%c0_5, %c0_6, %c0_7], %12 {strides = array<i32>} : memref<1x8x128xbf16, #tpu.memory_space<vmem>>, vector<1x8x128xbf16>,
    } else {
    }
    return
  }
  func.func @transform_0(%arg0: i32, %arg1: i32, %arg2: i32) -> (i32, i32, i32) {
    %c1_i32 = arith.constant 1 : i32
    %0 = arith.subi %c1_i32, %arg1 : i32
    %1 = arith.muli %arg2, %0 : i32
    %c1_i32_0 = arith.constant 1 : i32
    %2 = arith.muli %c1_i32_0, %arg1 : i32
    %3 = arith.addi %1, %2 : i32
    %c0_i32 = arith.constant 0 : i32
    %c0_i32_1 = arith.constant 0 : i32
    return %arg0, %c0_i32, %3 : i32, i32, i32
  }
  func.func @transform_1(%arg0: i32, %arg1: i32, %arg2: i32) -> (i32, i32) {
    %c1_i32 = arith.constant 1 : i32
    %0 = arith.subi %c1_i32, %arg1 : i32
    %1 = arith.muli %arg2, %0 : i32
    %c1_i32_0 = arith.constant 1 : i32
    %2 = arith.muli %c1_i32_0, %arg1 : i32
    %3 = arith.addi %1, %2 : i32
    %c0_i32 = arith.constant 0 : i32
    %c0_i32_1 = arith.constant 0 : i32
    return %3, %c0_i32 : i32, i32
  }
  func.func @transform_2(%arg0: i32, %arg1: i32, %arg2: i32) -> (i32, i32) {
    %0 = arith.muli %arg2, %arg1 : i32
    %c0_i32 = arith.constant 0 : i32
    %c0_i32_0 = arith.constant 0 : i32
    return %c0_i32, %0 : i32, i32
  }
  func.func @transform_3(%arg0: i32, %arg1: i32, %arg2: i32) -> (i32, i32) {
    %c0_i32 = arith.constant 0 : i32
    %c0_i32_0 = arith.constant 0 : i32
    %c0_i32_1 = arith.constant 0 : i32
    return %c0_i32, %c0_i32_0 : i32, i32
  }
  func.func @transform_4(%arg0: i32, %arg1: i32, %arg2: i32) -> (i32, i32) {
    %c0_i32 = arith.constant 0 : i32
    %c0_i32_0 = arith.constant 0 : i32
    %c0_i32_1 = arith.constant 0 : i32
    return %c0_i32, %c0_i32_0 : i32, i32
  }
  func.func @transform_5(%arg0: i32, %arg1: i32, %arg2: i32) -> (i32, i32) {
    %c0_i32 = arith.constant 0 : i32
    %c0_i32_0 = arith.constant 0 : i32
    %c0_i32_1 = arith.constant 0 : i32
    return %c0_i32, %c0_i32_0 : i32, i32
  }
  func.func @transform_6(%arg0: i32, %arg1: i32, %arg2: i32) -> (i32, i32, i32) {
    %0 = arith.muli %arg2, %arg1 : i32
    %c0_i32 = arith.constant 0 : i32
    %c0_i32_0 = arith.constant 0 : i32
    return %arg0, %c0_i32, %0 : i32, i32, i32
  }
}

</mosaic_0001>

<llo_original>
// kernel: tpu_custom_call.1
$region0: #{tpu_custom_call.1}
  #allocation0 [shape = 'u32[]', space=smem, size = 0x4, offset = 0x4, fixed_abs, tag = 'smem constant byte address 0x4 - core index']
  #allocation1 [shape = 'u32[144,128]{1,0:T(1,128)}', space=vmem, size = 0x12000, scoped, tag = 'internal scratch']
  #allocation2 [shape = 'f32[8,128]{1,0:T(8,128)}', space=vmem, size = 0x1000, scoped, tag = 'scratch operand']
  #allocation3 [shape = 'bf16[8,128]{1,0:T(8,128)(2,1)}', space=vmem, size = 0x800, scoped, tag = 'scratch operand']
  %s0 = inlined_call_operand.hbm [shape: bf16[2,8,256], index: 0, kind: input, shape index: {}]
  %s1 = inlined_call_operand.hbm [shape: bf16[256,128], index: 1, kind: input, shape index: {}]
  %s2 = inlined_call_operand.hbm [shape: bf16[128,256], index: 2, kind: input, shape index: {}]
  %s3 = inlined_call_operand.vmem [shape: bf16[8,8], index: 3, kind: input, shape index: {}]
  %s4 = inlined_call_operand.vmem [shape: f32[8,1], index: 4, kind: input, shape index: {}]
  %s5 = inlined_call_operand.vmem [shape: f32[8,128], index: 5, kind: input, shape index: {}]
  %s6 = inlined_call_operand.hbm [shape: bf16[2,8,256], index: 6, kind: output, shape index: {}]
  %s7 = sld [smem:[#allocation0]]
  $region85: #{tpu_custom_call.1} parent=0
    _
  %s9 = ssub.s32 1, %s7
  %s10 = scalar_select 0, %s9, %s7
  $region1: #{tpu_custom_call.1} parent=0
    #allocation4 [shape = 'u8[4096]{0}', space=vmem, size = 0x1000, scoped, tag = 'input window, operand 0']
    #allocation5 [shape = 's32[2]{0}', space=sflag, size = 0x8, scoped, tag = 'scoped memory for tpu_custom_call.1']
    #allocation6 [shape = 's32[2]{0}', space=sflag, size = 0x8, scoped, tag = 'scoped memory for tpu_custom_call.1']
    #allocation7 [shape = 'u8[65536]{0}', space=vmem, size = 0x10000, scoped, tag = 'input window, operand 1']
    #allocation8 [shape = 's32[2]{0}', space=sflag, size = 0x8, scoped, tag = 'scoped memory for tpu_custom_call.1']
    #allocation9 [shape = 'u8[65536]{0}', space=vmem, size = 0x10000, scoped, tag = 'input window, operand 2']
    #allocation10 [shape = 'u8[4096]{0}', space=vmem, size = 0x1000, scoped, tag = 'output window, operand 0']
    %11 = vsyncpa [#allocation5], 0
    %s12 = scalar_lea.sflag [#allocation5], 1
    %13 = vsyncpa %s12, 0
    %14 = vsyncpa [#allocation8], 0
    %s15 = scalar_lea.sflag [#allocation8], 1
    %16 = vsyncpa %s15, 0
    %17 = vsyncpa [#allocation6], 0
    %s18 = scalar_lea.sflag [#allocation6], 1
    %19 = vsyncpa %s18, 0
    loop: start=0, step=1, limit=10
    $region2: #{tpu_custom_call.1} parent=1 // loop_pre_header
      _
    $region3: #{tpu_custom_call.1} parent=1 // loop_header
      %s21 = sphi 0, %s25
      %p22 = scmp.ge.s32.totalorder %s21, 10
      %s28 = sphi 0, %s47
      %s29 = sphi 0, %s43
      %s30 = sphi 0, %s39
      %s31 = sphi 0, %s28
      %s32 = sphi 0, %s29
      %s33 = sphi 0, %s30
      %s34 = sphi 0, %s31
      %s35 = sphi 0, %s32
      %s36 = sphi 0, %s33
      %s58 = sphi 0, %s60
      %s61 = sphi 0, %s58
      %s62 = sphi 0, %s61
      %s78 = sphi 0, %s62
      %s90 = sphi 0, %s92
      %s93 = sphi 0, %s90
      %s94 = sphi 0, %s93
      %s110 = sphi 0, %s94
      %s118 = sphi 0, %s120
      %s121 = sphi 0, %s118
      %s122 = sphi 0, %s121
      %s138 = sphi 0, %s122
      %s142 = sphi 0, %s142
      %s144 = sphi 0, %s142
      %s145 = sphi 0, %s144
      %s159 = sphi 0, %s145
      %s163 = sphi 0, %s163
      %s165 = sphi 0, %s163
      %s166 = sphi 0, %s165
      %s180 = sphi 0, %s166
      %s184 = sphi 0, %s184
      %s186 = sphi 0, %s184
      %s187 = sphi 0, %s186
      %s201 = sphi 0, %s187
      %s211 = sphi 0, %s213
      %s214 = sphi 0, %s211
      %s215 = sphi 0, %s214
      %s231 = sphi 0, %s215
    $region4: #{tpu_custom_call.1} parent=1 // loop_header_branch
      %24 = sbr.rel (%p22) target = $region8
    $region5: #{tpu_custom_call.1} parent=1 // loop_body
      %s26 = ssub.s32 %s21, 1
      %s27 = ssub.s32 %s21, 2
      %s37 = sadd.s32 1, %s30
      %p38 = scmp.ge.s32.totalorder %s37, 2
      %s39 = scalar_select %p38, 0, %s37
      %s40 = sadd.s32 1, %s29
      %s41 = scalar_select %p38, %s40, %s29
      %p42 = scmp.ge.s32.totalorder %s41, 2
      %s43 = scalar_select %p42, 0, %s41
      %s44 = sadd.s32 1, %s28
      %s45 = scalar_select %p42, %s44, %s28
      %p46 = scmp.ge.s32.totalorder %s45, 2
      %s47 = scalar_select %p46, 0, %s45
      %s48 = ssub.s32 1, %s29
      %s49 = smul.u32 %s30, %s48
      %s50 = sadd.s32 %s49, %s29
      %s51 = ssub.s32 1, %s43
      %s52 = smul.u32 %s39, %s51
      %s53 = sadd.s32 %s52, %s43
      %s54 = ssub.s32 %s28, %s47
      %s55 = ssub.s32 %s50, %s53
      %s56 = sor.u32 %s54, %s55
      %p57 = scmp.eq.s32.totalorder %s56, 0
      %s59 = sadd.s32 %s58, 1
      %s60 = scalar_select %p57, %s58, %s59
      %p63 = pneg %p57
      %p64 = scmp.eq.s32.totalorder %s21, 7
      %p65 = por %p63, %p64
      %p66 = scmp.ne.s32.totalorder %s58, %s61
      %p67 = scmp.eq.s32.totalorder %s21, 0
      %p68 = por %p66, %p67
      %p69 = scmp.ne.s32.totalorder %s58, %s61
      %p70 = scmp.eq.s32.totalorder %s26, 7
      %p71 = por %p69, %p70
      %p72 = scmp.ne.s32.totalorder %s61, %s62
      %p73 = scmp.eq.s32.totalorder %s26, 0
      %p74 = por %p72, %p73
      %p75 = scmp.ne.s32.totalorder %s61, %s62
      %p76 = scmp.eq.s32.totalorder %s27, 7
      %p77 = por %p75, %p76
      %p79 = scmp.ne.s32.totalorder %s62, %s78
      %p80 = scmp.eq.s32.totalorder %s27, 0
      %p81 = por %p79, %p80
      %s82 = ssub.s32 1, %s29
      %s83 = smul.u32 %s30, %s82
      %s84 = sadd.s32 %s83, %s29
      %s85 = ssub.s32 1, %s43
      %s86 = smul.u32 %s39, %s85
      %s87 = sadd.s32 %s86, %s43
      %s88 = ssub.s32 %s84, %s87
      %p89 = scmp.eq.s32.totalorder %s88, 0
      %s91 = sadd.s32 %s90, 1
      %s92 = scalar_select %p89, %s90, %s91
      %p95 = pneg %p89
      %p96 = scmp.eq.s32.totalorder %s21, 7
      %p97 = por %p95, %p96
      %p98 = scmp.ne.s32.totalorder %s90, %s93
      %p99 = scmp.eq.s32.totalorder %s21, 0
      %p100 = por %p98, %p99
      %p101 = scmp.ne.s32.totalorder %s90, %s93
      %p102 = scmp.eq.s32.totalorder %s26, 7
      %p103 = por %p101, %p102
      %p104 = scmp.ne.s32.totalorder %s93, %s94
      %p105 = scmp.eq.s32.totalorder %s26, 0
      %p106 = por %p104, %p105
      %p107 = scmp.ne.s32.totalorder %s93, %s94
      %p108 = scmp.eq.s32.totalorder %s27, 7
      %p109 = por %p107, %p108
      %p111 = scmp.ne.s32.totalorder %s94, %s110
      %p112 = scmp.eq.s32.totalorder %s27, 0
      %p113 = por %p111, %p112
      %s114 = smul.u32 %s30, %s29
      %s115 = smul.u32 %s39, %s43
      %s116 = ssub.s32 %s114, %s115
      %p117 = scmp.eq.s32.totalorder %s116, 0
      %s119 = sadd.s32 %s118, 1
      %s120 = scalar_select %p117, %s118, %s119
      %p123 = pneg %p117
      %p124 = scmp.eq.s32.totalorder %s21, 7
      %p125 = por %p123, %p124
      %p126 = scmp.ne.s32.totalorder %s118, %s121
      %p127 = scmp.eq.s32.totalorder %s21, 0
      %p128 = por %p126, %p127
      %p129 = scmp.ne.s32.totalorder %s118, %s121
      %p130 = scmp.eq.s32.totalorder %s26, 7
      %p131 = por %p129, %p130
      %p132 = scmp.ne.s32.totalorder %s121, %s122
      %p133 = scmp.eq.s32.totalorder %s26, 0
      %p134 = por %p132, %p133
      %p135 = scmp.ne.s32.totalorder %s121, %s122
      %p136 = scmp.eq.s32.totalorder %s27, 7
      %p137 = por %p135, %p136
      %p139 = scmp.ne.s32.totalorder %s122, %s138
      %p140 = scmp.eq.s32.totalorder %s27, 0
      %p141 = por %p139, %p140
      %s143 = sadd.s32 %s142, 1
      %p146 = scmp.eq.s32.totalorder %s21, 7
      %p147 = scmp.ne.s32.totalorder %s142, %s144
      %p148 = scmp.eq.s32.totalorder %s21, 0
      %p149 = por %p147, %p148
      %p150 = scmp.ne.s32.totalorder %s142, %s144
      %p151 = scmp.eq.s32.totalorder %s26, 7
      %p152 = por %p150, %p151
      %p153 = scmp.ne.s32.totalorder %s144, %s145
      %p154 = scmp.eq.s32.totalorder %s26, 0
      %p155 = por %p153, %p154
      %p156 = scmp.ne.s32.totalorder %s144, %s145
      %p157 = scmp.eq.s32.totalorder %s27, 7
      %p158 = por %p156, %p157
      %p160 = scmp.ne.s32.totalorder %s145, %s159
      %p161 = scmp.eq.s32.totalorder %s27, 0
      %p162 = por %p160, %p161
      %s164 = sadd.s32 %s163, 1
      %p167 = scmp.eq.s32.totalorder %s21, 7
      %p168 = scmp.ne.s32.totalorder %s163, %s165
      %p169 = scmp.eq.s32.totalorder %s21, 0
      %p170 = por %p168, %p169
      %p171 = scmp.ne.s32.totalorder %s163, %s165
      %p172 = scmp.eq.s32.totalorder %s26, 7
      %p173 = por %p171, %p172
      %p174 = scmp.ne.s32.totalorder %s165, %s166
      %p175 = scmp.eq.s32.totalorder %s26, 0
      %p176 = por %p174, %p175
      %p177 = scmp.ne.s32.totalorder %s165, %s166
      %p178 = scmp.eq.s32.totalorder %s27, 7
      %p179 = por %p177, %p178
      %p181 = scmp.ne.s32.totalorder %s166, %s180
      %p182 = scmp.eq.s32.totalorder %s27, 0
      %p183 = por %p181, %p182
      %s185 = sadd.s32 %s184, 1
      %p188 = scmp.eq.s32.totalorder %s21, 7
      %p189 = scmp.ne.s32.totalorder %s184, %s186
      %p190 = scmp.eq.s32.totalorder %s21, 0
      %p191 = por %p189, %p190
      %p192 = scmp.ne.s32.totalorder %s184, %s186
      %p193 = scmp.eq.s32.totalorder %s26, 7
      %p194 = por %p192, %p193
      %p195 = scmp.ne.s32.totalorder %s186, %s187
      %p196 = scmp.eq.s32.totalorder %s26, 0
      %p197 = por %p195, %p196
      %p198 = scmp.ne.s32.totalorder %s186, %s187
      %p199 = scmp.eq.s32.totalorder %s27, 7
      %p200 = por %p198, %p199
      %p202 = scmp.ne.s32.totalorder %s187, %s201
      %p203 = scmp.eq.s32.totalorder %s27, 0
      %p204 = por %p202, %p203
      %s205 = smul.u32 %s30, %s29
      %s206 = smul.u32 %s39, %s43
      %s207 = ssub.s32 %s28, %s47
      %s208 = ssub.s32 %s205, %s206
      %s209 = sor.u32 %s207, %s208
      %p210 = scmp.eq.s32.totalorder %s209, 0
      %s212 = sadd.s32 %s211, 1
      %s213 = scalar_select %p210, %s211, %s212
      %p216 = pneg %p210
      %p217 = scmp.eq.s32.totalorder %s21, 7
      %p218 = por %p216, %p217
      %p219 = scmp.ne.s32.totalorder %s211, %s214
      %p220 = scmp.eq.s32.totalorder %s21, 0
      %p221 = por %p219, %p220
      %p222 = scmp.ne.s32.totalorder %s211, %s214
      %p223 = scmp.eq.s32.totalorder %s26, 7
      %p224 = por %p222, %p223
      %p225 = scmp.ne.s32.totalorder %s214, %s215
      %p226 = scmp.eq.s32.totalorder %s26, 0
      %p227 = por %p225, %p226
      %p228 = scmp.ne.s32.totalorder %s214, %s215
      %p229 = scmp.eq.s32.totalorder %s27, 7
      %p230 = por %p228, %p229
      %p232 = scmp.ne.s32.totalorder %s215, %s231
      %p233 = scmp.eq.s32.totalorder %s27, 0
      %p234 = por %p232, %p233
      %p235 = scmp.le.s32.totalorder 1, %s21
      %p236 = scmp.lt.s32.totalorder %s21, 9
      %p237 = pnand %p235, %p236
      %p238 = pneg %p237
      // Predicated region
      $region9: #{tpu_custom_call.1} parent=5 // pred_check
        _
      $region10: #{tpu_custom_call.1} parent=5 // pred_check_branch
        %240 = sbr.rel (%p237) target = $region12
      $region11: #{tpu_custom_call.1} parent=5 // pred_region
        %s241 = ssub.s32 %s21, 1
        // Predicated region
        $region13: #{tpu_custom_call.1} parent=11 // pred_check
          %p242 = pneg %p155
        $region14: #{tpu_custom_call.1} parent=11 // pred_check_branch
          %244 = sbr.rel (%p242) target = $region16
        $region15: #{tpu_custom_call.1} parent=11 // pred_region
          _
        $region16: #{tpu_custom_call.1} parent=11 // pred_fallthru
          _
        // Predicated region
        $region17: #{tpu_custom_call.1} parent=11 // pred_check
          %p245 = pneg %p176
        $region18: #{tpu_custom_call.1} parent=11 // pred_check_branch
          %247 = sbr.rel (%p245) target = $region20
        $region19: #{tpu_custom_call.1} parent=11 // pred_region
          _
        $region20: #{tpu_custom_call.1} parent=11 // pred_fallthru
          _
        // Predicated region
        $region21: #{tpu_custom_call.1} parent=11 // pred_check
          %p248 = pneg %p197
        $region22: #{tpu_custom_call.1} parent=11 // pred_check_branch
          %250 = sbr.rel (%p248) target = $region24
        $region23: #{tpu_custom_call.1} parent=11 // pred_region
          _
        $region24: #{tpu_custom_call.1} parent=11 // pred_fallthru
          _
      $region12: #{tpu_custom_call.1} parent=5 // pred_fallthru
        _
      %p251 = scmp.lt.s32.totalorder %s21, 8
      // Predicated region
      $region25: #{tpu_custom_call.1} parent=5 // pred_check
        %p252 = pneg %p251
      $region26: #{tpu_custom_call.1} parent=5 // pred_check_branch
        %254 = sbr.rel (%p252) target = $region28
      $region27: #{tpu_custom_call.1} parent=5 // pred_region
        // Predicated region
        $region29: #{tpu_custom_call.1} parent=27 // pred_check
          %p255 = pneg %p68
        $region30: #{tpu_custom_call.1} parent=27 // pred_check_branch
          %257 = sbr.rel (%p255) target = $region32
        $region31: #{tpu_custom_call.1} parent=27 // pred_region
          %s258 = sand.u32 %s58, 1
          %s259 = scalar_lea.sflag [#allocation5], %s258
          %s260 = sand.u32 %s58, 1
          %s261 = smul.addr %s260, 4
          %s262 = scalar_lea.vmem [#allocation4], %s261
          %s263 = ssub.s32 1, %s29
          %s264 = smul.u32 %s30, %s263
          %s265 = sadd.s32 %s264, %s29
          %s267 = ssub.s32 64, 64
          %268 = vsyncadd %s259, %s267
          %s269 = smul.addr %s28, 2
          %s270 = sadd.s32 %s265, %s269
          %s271 = smul.addr %s270, 64
          %s272 = scalar_lea.hbm %s0, %s271
          %s274 = sshll.u32 %s262, 4
          %s275 = int_to_ptr.vmem [resolvable:$true] %s274
          %277 = dma.hbm_to_vmem [thread:$0]  %s272, 64, %s275, %s259
        $region32: #{tpu_custom_call.1} parent=27 // pred_fallthru
          _
        // Predicated region
        $region33: #{tpu_custom_call.1} parent=27 // pred_check
          %p278 = pneg %p100
        $region34: #{tpu_custom_call.1} parent=27 // pred_check_branch
          %280 = sbr.rel (%p278) target = $region36
        $region35: #{tpu_custom_call.1} parent=27 // pred_region
          %s281 = sand.u32 %s21, 1
          %s282 = scalar_lea.sflag [#allocation8], %s281
          %s283 = sand.u32 %s90, 1
          %s284 = smul.addr %s283, 64
          %s285 = scalar_lea.vmem [#allocation7], %s284
          %s286 = ssub.s32 1, %s29
          %s287 = smul.u32 %s30, %s286
          %s288 = sadd.s32 %s287, %s29
          %s289 = smul.u32 16, %s288
          %s291 = ssub.s32 1024, 1024
          %292 = vsyncadd %s282, %s291
          %s293 = smul.addr %s289, 64
          %s294 = scalar_lea.hbm %s1, %s293
          %s295 = sshll.u32 %s285, 4
          %s296 = int_to_ptr.vmem [resolvable:$true] %s295
          %301 = dma.hbm_to_vmem [thread:$0]  %s294, 1024, %s296, %s282, 64, 64, 4
        $region36: #{tpu_custom_call.1} parent=27 // pred_fallthru
          _
        // Predicated region
        $region37: #{tpu_custom_call.1} parent=27 // pred_check
          %p302 = pneg %p128
        $region38: #{tpu_custom_call.1} parent=27 // pred_check_branch
          %304 = sbr.rel (%p302) target = $region40
        $region39: #{tpu_custom_call.1} parent=27 // pred_region
          %s305 = sand.u32 %s21, 1
          %s306 = scalar_lea.sflag [#allocation8], %s305
          %s307 = sand.u32 %s118, 1
          %s308 = smul.addr %s307, 64
          %s309 = scalar_lea.vmem [#allocation9], %s308
          %s310 = smul.u32 %s30, %s29
          %s312 = ssub.s32 1024, 1024
          %313 = vsyncadd %s306, %s312
          %s314 = smul.addr %s310, 64
          %s315 = scalar_lea.hbm %s2, %s314
          %s316 = sshll.u32 %s309, 4
          %s317 = int_to_ptr.vmem [resolvable:$true] %s316
          %322 = dma.hbm_to_vmem [thread:$0]  %s315, 1024, %s317, %s306, 128, 64, 4
        $region40: #{tpu_custom_call.1} parent=27 // pred_fallthru
          _
      $region28: #{tpu_custom_call.1} parent=5 // pred_fallthru
        _
      %p323 = scmp.le.s32.totalorder 1, %s21
      %p324 = scmp.lt.s32.totalorder %s21, 9
      %p325 = pnand %p323, %p324
      %p326 = pneg %p325
      // Predicated region
      $region41: #{tpu_custom_call.1} parent=5 // pred_check
        _
      $region42: #{tpu_custom_call.1} parent=5 // pred_check_branch
        %328 = sbr.rel (%p325) target = $region44
      $region43: #{tpu_custom_call.1} parent=5 // pred_region
        %s329 = ssub.s32 %s21, 1
        %s330 = sand.u32 %s61, 1
        %s331 = scalar_lea.sflag [#allocation5], %s330
        %s332 = sand.u32 %s61, 1
        %s333 = smul.addr %s332, 4
        %s334 = scalar_lea.vmem [#allocation4], %s333
        // Predicated region
        $region45: #{tpu_custom_call.1} parent=43 // pred_check
          %p335 = pneg %p74
        $region46: #{tpu_custom_call.1} parent=43 // pred_check_branch
          %337 = sbr.rel (%p335) target = $region48
        $region47: #{tpu_custom_call.1} parent=43 // pred_region
          %338 = dma.done %s331, 64
        $region48: #{tpu_custom_call.1} parent=43 // pred_fallthru
          _
        %s339 = sand.u32 %s26, 1
        %s340 = scalar_lea.sflag [#allocation8], %s339
        %s341 = sand.u32 %s93, 1
        %s342 = smul.addr %s341, 64
        %s343 = scalar_lea.vmem [#allocation7], %s342
        // Predicated region
        $region49: #{tpu_custom_call.1} parent=43 // pred_check
          %p344 = pneg %p106
        $region50: #{tpu_custom_call.1} parent=43 // pred_check_branch
          %346 = sbr.rel (%p344) target = $region52
        $region51: #{tpu_custom_call.1} parent=43 // pred_region
          %347 = dma.done %s340, 1024
        $region52: #{tpu_custom_call.1} parent=43 // pred_fallthru
          _
        %s348 = sand.u32 %s26, 1
        %s349 = scalar_lea.sflag [#allocation8], %s348
        %s350 = sand.u32 %s121, 1
        %s351 = smul.addr %s350, 64
        %s352 = scalar_lea.vmem [#allocation9], %s351
        // Predicated region
        $region53: #{tpu_custom_call.1} parent=43 // pred_check
          %p353 = pneg %p134
        $region54: #{tpu_custom_call.1} parent=43 // pred_check_branch
          %355 = sbr.rel (%p353) target = $region56
        $region55: #{tpu_custom_call.1} parent=43 // pred_region
          %356 = dma.done %s349, 1024
        $region56: #{tpu_custom_call.1} parent=43 // pred_fallthru
          _
        %s357 = sand.u32 %s61, 1
        %s358 = scalar_lea.sflag [#allocation5], %s357
        %s359 = sand.u32 %s61, 1
        %s360 = smul.addr %s359, 4
        %s361 = scalar_lea.vmem [#allocation4], %s360
        %p362 = pneg %p74
        %p363 = pneg %p71
        %s364 = sand.u32 %s26, 1
        %s365 = scalar_lea.sflag [#allocation8], %s364
        %s366 = sand.u32 %s93, 1
        %s367 = smul.addr %s366, 64
        %s368 = scalar_lea.vmem [#allocation7], %s367
        %p369 = pneg %p106
        %p370 = pneg %p103
        %s371 = sand.u32 %s26, 1
        %s372 = scalar_lea.sflag [#allocation8], %s371
        %s373 = sand.u32 %s121, 1
        %s374 = smul.addr %s373, 64
        %s375 = scalar_lea.vmem [#allocation9], %s374
        %p376 = pneg %p134
        %p377 = pneg %p131
        %p378 = pneg %p155
        %p379 = pneg %p152
        %p380 = pneg %p176
        %p381 = pneg %p173
        %p382 = pneg %p197
        %p383 = pneg %p194
        %p384 = pneg %p227
        %p385 = pneg %p224
        %s386 = sand.u32 %s214, 1
        %s387 = scalar_lea.sflag [#allocation6], %s386
        %s388 = sand.u32 %s214, 1
        %s389 = smul.addr %s388, 4
        %s390 = scalar_lea.vmem [#allocation10], %s389
        %s391 = ssub.s32 1, %s32
        %s392 = smul.u32 %s33, %s391
        %s393 = sadd.s32 %s392, %s32
        %s394 = ssub.s32 1, %s32
        %s395 = smul.u32 %s33, %s394
        %s396 = sadd.s32 %s395, %s32
        %s397 = smul.u32 16, %s396
        %s398 = smul.u32 %s33, %s32
        %s399 = smul.u32 %s33, %s32
        %p401 = scmp.eq.s32.totalorder %s32, 0
        // Predicated region
        $region57: #{tpu_custom_call.1} parent=43 // pred_check
          %p402 = pneg %p401
        $region58: #{tpu_custom_call.1} parent=43 // pred_check_branch
          %404 = sbr.rel (%p402) target = $region60
        $region59: #{tpu_custom_call.1} parent=43 // pred_region
          %p405 = scmp.eq.s32.totalorder %s33, 0
          // Predicated region
          $region61: #{tpu_custom_call.1} parent=59 // pred_check
            %p406 = pneg %p405
          $region62: #{tpu_custom_call.1} parent=59 // pred_check_branch
            %408 = sbr.rel (%p406) target = $region64
          $region63: #{tpu_custom_call.1} parent=59 // pred_region
            %409 = vst [vmem:[#allocation2] sm:$0xff] 0.0
          $region64: #{tpu_custom_call.1} parent=59 // pred_fallthru
            _
          %v410 = vld [vmem:[#allocation2] sm:$0xff]
          %v411 = vld [vmem:[%s334] sm:$0xf]
          %v412 = vld [vmem:[%s343] sm:$0xf]
          %v413 = vld [vmem:[%s343 + $0x4] sm:$0xf]
          %v414 = vld [vmem:[%s343 + $0x8] sm:$0xf]
          %v415 = vld [vmem:[%s343 + $0xc] sm:$0xf]
          %v416 = vld [vmem:[%s343 + $0x10] sm:$0xf]
          %v417 = vld [vmem:[%s343 + $0x14] sm:$0xf]
          %v418 = vld [vmem:[%s343 + $0x18] sm:$0xf]
          %v419 = vld [vmem:[%s343 + $0x1c] sm:$0xf]
          %v420 = vld [vmem:[%s343 + $0x20] sm:$0xf]
          %v421 = vld [vmem:[%s343 + $0x24] sm:$0xf]
          %v422 = vld [vmem:[%s343 + $0x28] sm:$0xf]
          %v423 = vld [vmem:[%s343 + $0x2c] sm:$0xf]
          %v424 = vld [vmem:[%s343 + $0x30] sm:$0xf]
          %v425 = vld [vmem:[%s343 + $0x34] sm:$0xf]
          %v426 = vld [vmem:[%s343 + $0x38] sm:$0xf]
          %v427 = vld [vmem:[%s343 + $0x3c] sm:$0xf]
          %v444 = vunpack.c.l.b16 %v412
          %v445 = vunpack.c.l.b16 %v413
          %v446 = vunpack.c.l.b16 %v414
          %v447 = vunpack.c.l.b16 %v415
          %v448 = vunpack.c.l.b16 %v416
          %v449 = vunpack.c.l.b16 %v417
          %v450 = vunpack.c.l.b16 %v418
          %v451 = vunpack.c.l.b16 %v419
          %v452 = vunpack.c.l.b16 %v420
          %v453 = vunpack.c.l.b16 %v421
          %v454 = vunpack.c.l.b16 %v422
          %v455 = vunpack.c.l.b16 %v423
          %v456 = vunpack.c.l.b16 %v424
          %v457 = vunpack.c.l.b16 %v425
          %v458 = vunpack.c.l.b16 %v426
          %v459 = vunpack.c.l.b16 %v427
          %v460 = vpack.c.b16 %v445, %v444
          %v461 = vpack.c.b16 %v447, %v446
          %v462 = vpack.c.b16 %v449, %v448
          %v463 = vpack.c.b16 %v451, %v450
          %v464 = vpack.c.b16 %v453, %v452
          %v465 = vpack.c.b16 %v455, %v454
          %v466 = vpack.c.b16 %v457, %v456
          %v467 = vpack.c.b16 %v459, %v458
          %476 = vmatprep.subr.bf16.mxu0 0
          %477 = vmatpush1.bf16.msra.mxu0 %v460
          %478 = vmatprep.subr.bf16.mxu0 0
          %479 = vmatpush1.bf16.msra.mxu0 %v461
          %480 = vmatprep.subr.bf16.mxu0 0
          %481 = vmatpush1.bf16.msra.mxu0 %v462
          %482 = vmatprep.subr.bf16.mxu0 0
          %483 = vmatpush1.bf16.msra.mxu0 %v463
          %484 = vmatprep.subr.bf16.mxu0 0
          %485 = vmatpush1.bf16.msra.mxu0 %v464
          %486 = vmatprep.subr.bf16.mxu0 0
          %487 = vmatpush1.bf16.msra.mxu0 %v465
          %488 = vmatprep.subr.bf16.mxu0 0
          %489 = vmatpush1.bf16.msra.mxu0 %v466
          %490 = vmatprep.subr.bf16.mxu0 0
          %491 = vmatpush1.bf16.msra.mxu0 %v467
          %492 = vmatprep.subr.bf16.mxu0 0
          %493 = vmatpush1.bf16.msra.mxu0 0
          %494 = vmatprep.subr.bf16.mxu0 0
          %495 = vmatpush1.bf16.msra.mxu0 0
          %496 = vmatprep.subr.bf16.mxu0 0
          %497 = vmatpush1.bf16.msra.mxu0 0
          %498 = vmatprep.subr.bf16.mxu0 0
          %499 = vmatpush1.bf16.msra.mxu0 0
          %500 = vmatprep.subr.bf16.mxu0 0
          %501 = vmatpush1.bf16.msra.mxu0 0
          %502 = vmatprep.subr.bf16.mxu0 0
          %503 = vmatpush1.bf16.msra.mxu0 0
          %504 = vmatprep.subr.bf16.mxu0 0
          %505 = vmatpush1.bf16.msra.mxu0 0
          %506 = vmatprep.subr.bf16.mxu0 0
          %507 = vmatpush1.bf16.msra.mxu0 0
          %508 = vmatprep.mubr.bf16.mxu0 0
          %509 = vmatmul.mubr.bf16.gmra.mrb[0].mxu0 %v411
          %v510 = vpop.f32.mrb[0].mxu0
          %v511 = vadd.f32 0.0, %v510
          %v512 = vpop.f32.mrb[0].mxu0
          %v513 = vpop.f32.mrb[0].mxu0
          %v514 = vpop.f32.mrb[0].mxu0
          %515 = vdwg.mxu0
          %v516 = vadd.f32 %v410, %v511
          %517 = vst [vmem:[#allocation2] sm:$0xff] %v516
          %p518 = scmp.eq.s32.totalorder %s33, 1
          // Predicated region
          $region65: #{tpu_custom_call.1} parent=59 // pred_check
            %p519 = pneg %p518
          $region66: #{tpu_custom_call.1} parent=59 // pred_check_branch
            %521 = sbr.rel (%p519) target = $region68
          $region67: #{tpu_custom_call.1} parent=59 // pred_region
            %v522 = vld [vmem:[%s3] sm:$0xf]
            %v523 = vld [vmem:[#allocation2] sm:$0xff]
            %v524 = vpack.c.bf16 %v523, %v523
            %v525 = vld [vmem:[%s4] sm:$0xff]
            %527 = vset.pattern.permute.xlu0 0
            %528 = vperm.xlu0 %527, %v525
            %v529 = vpop.permute.xlu0 %528
            %vm531 = vcmask 64512
            %v533 = vsel %vm531, %v522, 0
            %vm535 = vcmask 1043456
            %v537 = vsel %vm535, %v524, 0
            %539 = vmatprep.subr.bf16.mxu0 0
            %540 = vmatpush1.bf16.msra.mxu0 %v537
            %541 = vmatprep.subr.bf16.mxu0 0
            %542 = vmatpush1.bf16.msra.mxu0 0
            %543 = vmatprep.subr.bf16.mxu0 0
            %544 = vmatpush1.bf16.msra.mxu0 0
            %545 = vmatprep.subr.bf16.mxu0 0
            %546 = vmatpush1.bf16.msra.mxu0 0
            %547 = vmatprep.subr.bf16.mxu0 0
            %548 = vmatpush1.bf16.msra.mxu0 0
            %549 = vmatprep.subr.bf16.mxu0 0
            %550 = vmatpush1.bf16.msra.mxu0 0
            %551 = vmatprep.subr.bf16.mxu0 0
            %552 = vmatpush1.bf16.msra.mxu0 0
            %553 = vmatprep.subr.bf16.mxu0 0
            %554 = vmatpush1.bf16.msra.mxu0 0
            %555 = vmatprep.subr.bf16.mxu0 0
            %556 = vmatpush1.bf16.msra.mxu0 0
            %557 = vmatprep.subr.bf16.mxu0 0
            %558 = vmatpush1.bf16.msra.mxu0 0
            %559 = vmatprep.subr.bf16.mxu0 0
            %560 = vmatpush1.bf16.msra.mxu0 0
            %561 = vmatprep.subr.bf16.mxu0 0
            %562 = vmatpush1.bf16.msra.mxu0 0
            %563 = vmatprep.subr.bf16.mxu0 0
            %564 = vmatpush1.bf16.msra.mxu0 0
            %565 = vmatprep.subr.bf16.mxu0 0
            %566 = vmatpush1.bf16.msra.mxu0 0
            %567 = vmatprep.subr.bf16.mxu0 0
            %568 = vmatpush1.bf16.msra.mxu0 0
            %569 = vmatprep.subr.bf16.mxu0 0
            %570 = vmatpush1.bf16.msra.mxu0 0
            %571 = vmatprep.mubr.bf16.mxu0 0
            %572 = vmatmul.mubr.bf16.gmra.mrb[0].mxu0 %v533
            %v573 = vpop.f32.mrb[0].mxu0
            %v574 = vadd.f32 %v529, %v573
            %v575 = vpop.f32.mrb[0].mxu0
            %v576 = vpop.f32.mrb[0].mxu0
            %v577 = vpop.f32.mrb[0].mxu0
            %578 = vdwg.mxu0
            %v579 = vmax.f32 %v574, 0.0
            %v580 = vld [vmem:[%s5] sm:$0xff]
            %v581 = vmul.f32 %v579, %v580
            %v582 = vpack.c.bf16 %v581, %v581
            %583 = vst [vmem:[#allocation3] sm:$0xf] %v582
          $region68: #{tpu_custom_call.1} parent=59 // pred_fallthru
            _
        $region60: #{tpu_custom_call.1} parent=43 // pred_fallthru
          _
        %p584 = scmp.eq.s32.totalorder %s32, 1
        // Predicated region
        $region69: #{tpu_custom_call.1} parent=43 // pred_check
          %p585 = pneg %p584
        $region70: #{tpu_custom_call.1} parent=43 // pred_check_branch
          %587 = sbr.rel (%p585) target = $region72
        $region71: #{tpu_custom_call.1} parent=43 // pred_region
          %v588 = vld [vmem:[#allocation3] sm:$0xf]
          %v589 = vld [vmem:[%s352] sm:$0xf]
          %v590 = vld [vmem:[%s352 + $0x4] sm:$0xf]
          %v591 = vld [vmem:[%s352 + $0x8] sm:$0xf]
          %v592 = vld [vmem:[%s352 + $0xc] sm:$0xf]
          %v593 = vld [vmem:[%s352 + $0x10] sm:$0xf]
          %v594 = vld [vmem:[%s352 + $0x14] sm:$0xf]
          %v595 = vld [vmem:[%s352 + $0x18] sm:$0xf]
          %v596 = vld [vmem:[%s352 + $0x1c] sm:$0xf]
          %v597 = vld [vmem:[%s352 + $0x20] sm:$0xf]
          %v598 = vld [vmem:[%s352 + $0x24] sm:$0xf]
          %v599 = vld [vmem:[%s352 + $0x28] sm:$0xf]
          %v600 = vld [vmem:[%s352 + $0x2c] sm:$0xf]
          %v601 = vld [vmem:[%s352 + $0x30] sm:$0xf]
          %v602 = vld [vmem:[%s352 + $0x34] sm:$0xf]
          %v603 = vld [vmem:[%s352 + $0x38] sm:$0xf]
          %v604 = vld [vmem:[%s352 + $0x3c] sm:$0xf]
          %v621 = vunpack.c.l.b16 %v589
          %v622 = vunpack.c.l.b16 %v590
          %v623 = vunpack.c.l.b16 %v591
          %v624 = vunpack.c.l.b16 %v592
          %v625 = vunpack.c.l.b16 %v593
          %v626 = vunpack.c.l.b16 %v594
          %v627 = vunpack.c.l.b16 %v595
          %v628 = vunpack.c.l.b16 %v596
          %v629 = vunpack.c.l.b16 %v597
          %v630 = vunpack.c.l.b16 %v598
          %v631 = vunpack.c.l.b16 %v599
          %v632 = vunpack.c.l.b16 %v600
          %v633 = vunpack.c.l.b16 %v601
          %v634 = vunpack.c.l.b16 %v602
          %v635 = vunpack.c.l.b16 %v603
          %v636 = vunpack.c.l.b16 %v604
          %v637 = vpack.c.b16 %v622, %v621
          %v638 = vpack.c.b16 %v624, %v623
          %v639 = vpack.c.b16 %v626, %v625
          %v640 = vpack.c.b16 %v628, %v627
          %v641 = vpack.c.b16 %v630, %v629
          %v642 = vpack.c.b16 %v632, %v631
          %v643 = vpack.c.b16 %v634, %v633
          %v644 = vpack.c.b16 %v636, %v635
          %653 = vmatprep.subr.bf16.mxu0 0
          %654 = vmatpush1.bf16.msra.mxu0 %v637
          %655 = vmatprep.subr.bf16.mxu0 0
          %656 = vmatpush1.bf16.msra.mxu0 %v638
          %657 = vmatprep.subr.bf16.mxu0 0
          %658 = vmatpush1.bf16.msra.mxu0 %v639
          %659 = vmatprep.subr.bf16.mxu0 0
          %660 = vmatpush1.bf16.msra.mxu0 %v640
          %661 = vmatprep.subr.bf16.mxu0 0
          %662 = vmatpush1.bf16.msra.mxu0 %v641
          %663 = vmatprep.subr.bf16.mxu0 0
          %664 = vmatpush1.bf16.msra.mxu0 %v642
          %665 = vmatprep.subr.bf16.mxu0 0
          %666 = vmatpush1.bf16.msra.mxu0 %v643
          %667 = vmatprep.subr.bf16.mxu0 0
          %668 = vmatpush1.bf16.msra.mxu0 %v644
          %669 = vmatprep.subr.bf16.mxu0 0
          %670 = vmatpush1.bf16.msra.mxu0 0
          %671 = vmatprep.subr.bf16.mxu0 0
          %672 = vmatpush1.bf16.msra.mxu0 0
          %673 = vmatprep.subr.bf16.mxu0 0
          %674 = vmatpush1.bf16.msra.mxu0 0
          %675 = vmatprep.subr.bf16.mxu0 0
          %676 = vmatpush1.bf16.msra.mxu0 0
          %677 = vmatprep.subr.bf16.mxu0 0
          %678 = vmatpush1.bf16.msra.mxu0 0
          %679 = vmatprep.subr.bf16.mxu0 0
          %680 = vmatpush1.bf16.msra.mxu0 0
          %681 = vmatprep.subr.bf16.mxu0 0
          %682 = vmatpush1.bf16.msra.mxu0 0
          %683 = vmatprep.subr.bf16.mxu0 0
          %684 = vmatpush1.bf16.msra.mxu0 0
          %685 = vmatprep.mubr.bf16.mxu0 0
          %686 = vmatmul.mubr.bf16.gmra.mrb[0].mxu0 %v588
          %v687 = vpop.f32.mrb[0].mxu0
          %v688 = vadd.f32 0.0, %v687
          %v689 = vpop.f32.mrb[0].mxu0
          %v690 = vpop.f32.mrb[0].mxu0
          %v691 = vpop.f32.mrb[0].mxu0
          %692 = vdwg.mxu0
          %v693 = vpack.c.bf16 %v688, %v688
          %694 = vst [vmem:[%s390] sm:$0xf] %v693
        $region72: #{tpu_custom_call.1} parent=43 // pred_fallthru
          _
        %s695 = sand.u32 %s214, 1
        %s696 = scalar_lea.sflag [#allocation6], %s695
        %s697 = sand.u32 %s214, 1
        %s698 = smul.addr %s697, 4
        %s699 = scalar_lea.vmem [#allocation10], %s698
        // Predicated region
        $region73: #{tpu_custom_call.1} parent=43 // pred_check
          %p700 = pneg %p224
        $region74: #{tpu_custom_call.1} parent=43 // pred_check_branch
          %702 = sbr.rel (%p700) target = $region76
        $region75: #{tpu_custom_call.1} parent=43 // pred_region
          %s703 = smul.u32 %s33, %s32
          %s705 = ssub.s32 64, 64
          %706 = vsyncadd %s696, %s705
          %s707 = smul.addr %s31, 2
          %s708 = sadd.s32 %s703, %s707
          %s709 = smul.addr %s708, 64
          %s710 = scalar_lea.hbm %s6, %s709
          %s712 = sshll.u32 %s699, 4
          %s713 = int_to_ptr.vmem [resolvable:$true] %s712
          %715 = dma.vmem_to_hbm [thread:$0]  %s713, 64, %s710, %s696
        $region76: #{tpu_custom_call.1} parent=43 // pred_fallthru
          _
      $region44: #{tpu_custom_call.1} parent=5 // pred_fallthru
        _
      %p716 = scmp.le.s32.totalorder 2, %s21
      // Predicated region
      $region77: #{tpu_custom_call.1} parent=5 // pred_check
        %p717 = pneg %p716
      $region78: #{tpu_custom_call.1} parent=5 // pred_check_branch
        %719 = sbr.rel (%p717) target = $region80
      $region79: #{tpu_custom_call.1} parent=5 // pred_region
        %s720 = ssub.s32 %s21, 2
        // Predicated region
        $region81: #{tpu_custom_call.1} parent=79 // pred_check
          %p721 = pneg %p230
        $region82: #{tpu_custom_call.1} parent=79 // pred_check_branch
          %723 = sbr.rel (%p721) target = $region84
        $region83: #{tpu_custom_call.1} parent=79 // pred_region
          %s724 = sand.u32 %s215, 1
          %s725 = scalar_lea.sflag [#allocation6], %s724
          %s726 = sand.u32 %s215, 1
          %s727 = smul.addr %s726, 4
          %s728 = scalar_lea.vmem [#allocation10], %s727
          %729 = dma.done %s725, 64
        $region84: #{tpu_custom_call.1} parent=79 // pred_fallthru
          _
      $region80: #{tpu_custom_call.1} parent=5 // pred_fallthru
        _
    $region6: #{tpu_custom_call.1} parent=1 // loop_footer
      %s25 = sadd.s32 1, %s21
    $region7: #{tpu_custom_call.1} parent=1 // loop_footer_branch
      %20 = sbr.rel target = $region3
    $region8: #{tpu_custom_call.1} parent=1 // loop_exit
      _
    %730 = vsyncpa [#allocation5], 1
    %s731 = scalar_lea.sflag [#allocation5], 1
    %732 = vsyncpa %s731, 1
    %733 = vsyncpa [#allocation8], 1
    %s734 = scalar_lea.sflag [#allocation8], 1
    %735 = vsyncpa %s734, 1
    %736 = vsyncpa [#allocation6], 1
    %s737 = scalar_lea.sflag [#allocation6], 1
    %738 = vsyncpa %s737, 1

</llo_original>
